<compile_context>
chip_gen: v7x
topology: tpu7x:2x2x1
jax: 0.10.0
libtpu: 0.0.40
codegen_flags: <defaults>
</compile_context>

<pallas_src>
import jax
import jax.numpy as jnp
from jax.experimental import pallas as pl
from jax.experimental.pallas import tpu as pltpu


_LANE = 128     # lane width (last dim granularity)
_SUBLANE = 8    # sublane granularity (second-to-last dim)


def _round_up(n, m):
    return ((n + m - 1) // m) * m


def _linear_sigmoid_kernel(x_ref, w_ref, b_ref, o_ref):
    # x_ref: [TB, F_in_p]  w_ref: [F_in_p, F_out_p]  b_ref: [1, F_out_p]
    # o_ref: [TB, F_out_p]
    acc = jnp.dot(x_ref[...], w_ref[...], preferred_element_type=jnp.float32)
    acc = acc + b_ref[...]                      # bias broadcast over batch rows
    # Sigmoid epilogue kept in f32 (no bf16 VPU/EUP on v5e); exp + reciprocal
    # both route to the EUP slot, leaving VALU slots nearly free.
    o_ref[...] = jax.nn.sigmoid(acc).astype(o_ref.dtype)
    # Dropout: identity in eval mode (see TODO at top of file).


def tembed_kl_pred_head_linear(x, w_t, b, *, block_b=512, use_bf16_matmul=False):
    """y = sigmoid(x @ w_t + b), eval-mode dropout (identity).

    x:   [B, F_in]
    w_t: [F_in, F_out]  (weight already transposed, i.e. W.T)
    b:   [F_out]
    """
    B, F_in = x.shape
    F_in_w, F_out = w_t.shape
    assert F_in_w == F_in, "w_t must be [F_in, F_out]"
    out_dtype = x.dtype

    # --- Lane-pad features; sublane-pad / tile the batch ---------------------
    f_in_p = _round_up(F_in, _LANE)
    f_out_p = _round_up(F_out, _LANE)
    tb = min(_round_up(B, _SUBLANE), _round_up(block_b, _SUBLANE))
    b_p = _round_up(B, tb)

    mm_dtype = jnp.bfloat16 if use_bf16_matmul else x.dtype

    # Zero padding: padded K-columns contribute 0 to the contraction; padded
    # output columns / batch rows are sliced off below.  (In a real model the
    # weight/bias padding would be done once at parameter-setup time.)
    x_p = jnp.zeros((b_p, f_in_p), mm_dtype).at[:B, :F_in].set(x.astype(mm_dtype))
    w_p = jnp.zeros((f_in_p, f_out_p), mm_dtype).at[:F_in, :F_out].set(
        w_t.astype(mm_dtype))
    b2d = jnp.zeros((1, f_out_p), jnp.float32).at[:, :F_out].set(
        b.astype(jnp.float32))

    grid = (b_p // tb,)

    cost = pl.CostEstimate(
        flops=2 * b_p * f_in_p * f_out_p,
        transcendentals=b_p * f_out_p,
        bytes_accessed=(x_p.size * x_p.dtype.itemsize
                        + w_p.size * w_p.dtype.itemsize
                        + b2d.size * 4
                        + b_p * f_out_p * jnp.dtype(out_dtype).itemsize),
    )

    y_p = pl.pallas_call(
        _linear_sigmoid_kernel,
        out_shape=jax.ShapeDtypeStruct((b_p, f_out_p), out_dtype),
        grid_spec=pltpu.PrefetchScalarGridSpec(
            num_scalar_prefetch=0,
            grid=grid,
            in_specs=[
                # Activations: tiled over batch (double-buffered DMA).
                pl.BlockSpec((tb, f_in_p), lambda i: (i, 0)),
                # Weight + bias: VMEM-resident across all grid steps.
                pl.BlockSpec((f_in_p, f_out_p), lambda i: (0, 0)),
                pl.BlockSpec((1, f_out_p), lambda i: (0, 0)),
            ],
            out_specs=pl.BlockSpec((tb, f_out_p), lambda i: (i, 0)),
        ),
        compiler_params=pltpu.CompilerParams(
            # Independent batch tiles -> shardable across TCs on v7x.
            dimension_semantics=("parallel",),
        ),
        cost_estimate=cost,
    )(x_p, w_p, b2d)

    return y_p[:B, :F_out]


if __name__ == "__main__":
    # Small shapes consistent with the module: batch=8, in_features=32, out_features=16.
    B, F_IN, F_OUT = 8, 32, 16
    key = jax.random.PRNGKey(0)
    kx, kw, kb = jax.random.split(key, 3)

    # Deterministic parameter init mimicking nn.Linear default:
    # uniform(-1/sqrt(in_features), +1/sqrt(in_features))
    bound = 1.0 / jnp.sqrt(jnp.float32(F_IN))
    W = jax.random.uniform(kw, (F_OUT, F_IN), jnp.float32, -bound, bound)
    b = jax.random.uniform(kb, (F_OUT,), jnp.float32, -bound, bound)
    x = jax.random.normal(kx, (B, F_IN), jnp.float32)

    # Pre-transpose the weight ONCE (hoisted out of the per-call path).
    w_t = jnp.asarray(W.T)

    y = tembed_kl_pred_head_linear(x, w_t, b)
    y = jax.block_until_ready(y)

    # Reference check (eval-mode dropout == identity), f32 everywhere.
    y_ref = jax.nn.sigmoid(x @ W.T + b)
    assert y.shape == (B, F_OUT)
    assert jnp.allclose(y, y_ref, atol=1e-5, rtol=1e-5), "mismatch vs reference"

    print("KERNEL_OK")
</pallas_src>

<mosaic_0001>
module attributes {stable_mosaic.version = 11 : i64} {
  func.func @_linear_sigmoid_kernel(%arg0: i32, %arg1: memref<8x128xf32, #tpu.memory_space<vmem>>, %arg2: memref<128x128xf32, #tpu.memory_space<vmem>>, %arg3: memref<1x128xf32, #tpu.memory_space<vmem>>, %arg4: memref<8x128xf32, #tpu.memory_space<vmem>>) attributes {dimension_semantics = [#tpu.dimension_semantics<parallel>], iteration_bounds = array<i64: 1>, scalar_prefetch = 0 : i64, scratch_operands = 0 : i64, tpu.core_type = #tpu.core_type<tc>, window_params = [{transform_indices = @transform_0, window_bounds = array<i64: 8, 128>}, {pipeline_mode = #tpu.pipeline_mode<synchronous>, transform_indices = @transform_1, window_bounds = array<i64: 128, 128>}, {pipeline_mode = #tpu.pipeline_mode<synchronous>, transform_indices = @transform_2, window_bounds = array<i64: 1, 128>}, {transform_indices = @transform_3, window_bounds = array<i64: 8, 128>}]} {
    %c0 = arith.constant 0 : index
    %c0_0 = arith.constant 0 : index
    %0 = vector.load %arg1[%c0, %c0_0] : memref<8x128xf32, #tpu.memory_space<vmem>>, vector<8x128xf32>
    %c0_1 = arith.constant 0 : index
    %c0_2 = arith.constant 0 : index
    %1 = vector.load %arg2[%c0_1, %c0_2] : memref<128x128xf32, #tpu.memory_space<vmem>>, vector<128x128xf32>
    %cst = arith.constant dense<0.000000e+00> : vector<8x128xf32>
    %2 = tpu.matmul %0, %1, %cst {dimension_numbers = #tpu.dot_dimension_numbers<[1], [0], [0], [1], [0, 0, 1, 1], [], []>} : vector<8x128xf32>, vector<128x128xf32>, vector<8x128xf32> -> vector<8x128xf32>
    %c0_3 = arith.constant 0 : index
    %c0_4 = arith.constant 0 : index
    %3 = vector.load %arg3[%c0_3, %c0_4] : memref<1x128xf32, #tpu.memory_space<vmem>>, vector<1x128xf32>
    %4 = vector.broadcast %3 : vector<1x128xf32> to vector<8x128xf32>
    %5 = arith.addf %2, %4 : vector<8x128xf32>
    %6 = arith.negf %5 : vector<8x128xf32>
    %7 = math.exp %6 : vector<8x128xf32>
    %cst_5 = arith.constant 1.000000e+00 : f32
    %8 = vector.broadcast %cst_5 : f32 to vector<8x128xf32>
    %9 = arith.addf %8, %7 : vector<8x128xf32>
    %10 = arith.divf %8, %9 : vector<8x128xf32>
    %c0_6 = arith.constant 0 : index
    %c0_7 = arith.constant 0 : index
    %11 = vector.load %arg4[%c0_6, %c0_7] : memref<8x128xf32, #tpu.memory_space<vmem>>, vector<8x128xf32>
    tpu.vector_store %arg4[%c0_6, %c0_7], %10 {strides = array<i32>} : memref<8x128xf32, #tpu.memory_space<vmem>>, vector<8x128xf32>,
    return
  }
  func.func @transform_0(%arg0: i32) -> (i32, i32) {
    %c0_i32 = arith.constant 0 : i32
    %c0_i32_0 = arith.constant 0 : i32
    return %arg0, %c0_i32 : i32, i32
  }
  func.func @transform_1(%arg0: i32) -> (i32, i32) {
    %c0_i32 = arith.constant 0 : i32
    %c0_i32_0 = arith.constant 0 : i32
    %c0_i32_1 = arith.constant 0 : i32
    return %c0_i32, %c0_i32_0 : i32, i32
  }
  func.func @transform_2(%arg0: i32) -> (i32, i32) {
    %c0_i32 = arith.constant 0 : i32
    %c0_i32_0 = arith.constant 0 : i32
    %c0_i32_1 = arith.constant 0 : i32
    return %c0_i32, %c0_i32_0 : i32, i32
  }
  func.func @transform_3(%arg0: i32) -> (i32, i32) {
    %c0_i32 = arith.constant 0 : i32
    %c0_i32_0 = arith.constant 0 : i32
    return %arg0, %c0_i32 : i32, i32
  }
}

</mosaic_0001>

<llo_original>
// kernel: tpu_custom_call.1
$region0: #{tpu_custom_call.1}
  #allocation0 [shape = 'u32[]', space=smem, size = 0x4, offset = 0x4, fixed_abs, tag = 'smem constant byte address 0x4 - core index']
  #allocation1 [shape = 'u32[144,128]{1,0:T(1,128)}', space=vmem, size = 0x12000, scoped, tag = 'internal scratch']
  %s0 = inlined_call_operand.hbm [shape: f32[8,128], index: 0, kind: input, shape index: {}]
  %s1 = inlined_call_operand.hbm [shape: f32[128,128], index: 1, kind: input, shape index: {}]
  %s2 = inlined_call_operand.vmem [shape: f32[1,128], index: 2, kind: input, shape index: {}]
  %s3 = inlined_call_operand.hbm [shape: f32[8,128], index: 3, kind: output, shape index: {}]
  %s4 = sld [smem:[#allocation0]]
  $region30: #{tpu_custom_call.1} parent=0
    _
  %s6 = ssub.s32 1, %s4
  %s7 = scalar_select 0, %s6, %s4
  $region1: #{tpu_custom_call.1} parent=0
    #allocation2 [shape = 'u8[4096]{0}', space=vmem, size = 0x1000, scoped, tag = 'input window, operand 0, single buffered']
    #allocation3 [shape = 's32[1]{0}', space=sflag, size = 0x4, scoped, tag = 'scoped memory for tpu_custom_call.1']
    #allocation4 [shape = 's32[1]{0}', space=sflag, size = 0x4, scoped, tag = 'scoped memory for tpu_custom_call.1']
    #allocation5 [shape = 'u8[65536]{0}', space=vmem, size = 0x10000, scoped, tag = 'input window, operand 1, single buffered']
    #allocation6 [shape = 's32[1]{0}', space=sflag, size = 0x4, scoped, tag = 'scoped memory for tpu_custom_call.1']
    #allocation7 [shape = 'u8[4096]{0}', space=vmem, size = 0x1000, scoped, tag = 'output window, operand 0, single buffered']
    %8 = vsyncpa [#allocation3], 0
    %9 = vsyncpa [#allocation6], 0
    %10 = vsyncpa [#allocation4], 0
    // Predicated region
    $region2: #{tpu_custom_call.1} parent=1 // pred_check
      _
    $region3: #{tpu_custom_call.1} parent=1 // pred_check_branch
      %12 = sbr.rel (0) target = $region5
    $region4: #{tpu_custom_call.1} parent=1 // pred_region
      %s14 = ssub.s32 128, 128
      %15 = vsyncadd [#allocation3], %s14
      %s17 = sshll.u32 [#allocation2], 4
      %s18 = int_to_ptr.vmem [resolvable:$true] %s17
      %20 = dma.hbm_to_vmem [thread:$0]  %s0, 128, %s18, [#allocation3]
    $region5: #{tpu_custom_call.1} parent=1 // pred_fallthru
      _
    // Predicated region
    $region6: #{tpu_custom_call.1} parent=1 // pred_check
      _
    $region7: #{tpu_custom_call.1} parent=1 // pred_check_branch
      %22 = sbr.rel (0) target = $region9
    $region8: #{tpu_custom_call.1} parent=1 // pred_region
      %s24 = ssub.s32 2048, 2048
      %25 = vsyncadd [#allocation6], %s24
      %s26 = sshll.u32 [#allocation5], 4
      %s27 = int_to_ptr.vmem [resolvable:$true] %s26
      %32 = dma.hbm_to_vmem [thread:$0]  %s1, 2048, %s27, [#allocation6], 128, 128, 8
    $region9: #{tpu_custom_call.1} parent=1 // pred_fallthru
      _
    // Predicated region
    $region10: #{tpu_custom_call.1} parent=1 // pred_check
      _
    $region11: #{tpu_custom_call.1} parent=1 // pred_check_branch
      %34 = sbr.rel (0) target = $region13
    $region12: #{tpu_custom_call.1} parent=1 // pred_region
      _
    $region13: #{tpu_custom_call.1} parent=1 // pred_fallthru
      _
    // Predicated region
    $region14: #{tpu_custom_call.1} parent=1 // pred_check
      _
    $region15: #{tpu_custom_call.1} parent=1 // pred_check_branch
      %36 = sbr.rel (0) target = $region17
    $region16: #{tpu_custom_call.1} parent=1 // pred_region
      %37 = dma.done [#allocation3], 128
    $region17: #{tpu_custom_call.1} parent=1 // pred_fallthru
      _
    // Predicated region
    $region18: #{tpu_custom_call.1} parent=1 // pred_check
      _
    $region19: #{tpu_custom_call.1} parent=1 // pred_check_branch
      %39 = sbr.rel (0) target = $region21
    $region20: #{tpu_custom_call.1} parent=1 // pred_region
      %40 = dma.done [#allocation6], 2048
    $region21: #{tpu_custom_call.1} parent=1 // pred_fallthru
      _
    %v41 = vld [vmem:[#allocation2] sm:$0xff]
    %v42 = vld [vmem:[#allocation5] sm:$0xff]
    %v43 = vld [vmem:[#allocation5 + $0x8] sm:$0xff]
    %v44 = vld [vmem:[#allocation5 + $0x10] sm:$0xff]
    %v45 = vld [vmem:[#allocation5 + $0x18] sm:$0xff]
    %v46 = vld [vmem:[#allocation5 + $0x20] sm:$0xff]
    %v47 = vld [vmem:[#allocation5 + $0x28] sm:$0xff]
    %v48 = vld [vmem:[#allocation5 + $0x30] sm:$0xff]
    %v49 = vld [vmem:[#allocation5 + $0x38] sm:$0xff]
    %v50 = vld [vmem:[#allocation5 + $0x40] sm:$0xff]
    %v51 = vld [vmem:[#allocation5 + $0x48] sm:$0xff]
    %v52 = vld [vmem:[#allocation5 + $0x50] sm:$0xff]
    %v53 = vld [vmem:[#allocation5 + $0x58] sm:$0xff]
    %v54 = vld [vmem:[#allocation5 + $0x60] sm:$0xff]
    %v55 = vld [vmem:[#allocation5 + $0x68] sm:$0xff]
    %v56 = vld [vmem:[#allocation5 + $0x70] sm:$0xff]
    %v57 = vld [vmem:[#allocation5 + $0x78] sm:$0xff]
    %v58 = vld [vmem:[%s2] sm:$0x1]
    %v60 = vlaneseq
    %v61 = vshrl.u32 %v60, 7
    %v62 = vsub.s32 0, %v61
    %v63 = vrot.slane %v58, %v62
    %65 = vmatprep.subr.mxu0 0.0
    %66 = vmatpush1.msra.mxu0 %v42
    %67 = vmatprep.subr.mxu0 0.0
    %68 = vmatpush1.msra.mxu0 %v43
    %69 = vmatprep.subr.mxu0 0.0
    %70 = vmatpush1.msra.mxu0 %v44
    %71 = vmatprep.subr.mxu0 0.0
    %72 = vmatpush1.msra.mxu0 %v45
    %73 = vmatprep.subr.mxu0 0.0
    %74 = vmatpush1.msra.mxu0 %v46
    %75 = vmatprep.subr.mxu0 0.0
    %76 = vmatpush1.msra.mxu0 %v47
    %77 = vmatprep.subr.mxu0 0.0
    %78 = vmatpush1.msra.mxu0 %v48
    %79 = vmatprep.subr.mxu0 0.0
    %80 = vmatpush1.msra.mxu0 %v49
    %81 = vmatprep.subr.mxu0 0.0
    %82 = vmatpush1.msra.mxu0 %v50
    %83 = vmatprep.subr.mxu0 0.0
    %84 = vmatpush1.msra.mxu0 %v51
    %85 = vmatprep.subr.mxu0 0.0
    %86 = vmatpush1.msra.mxu0 %v52
    %87 = vmatprep.subr.mxu0 0.0
    %88 = vmatpush1.msra.mxu0 %v53
    %89 = vmatprep.subr.mxu0 0.0
    %90 = vmatpush1.msra.mxu0 %v54
    %91 = vmatprep.subr.mxu0 0.0
    %92 = vmatpush1.msra.mxu0 %v55
    %93 = vmatprep.subr.mxu0 0.0
    %94 = vmatpush1.msra.mxu0 %v56
    %95 = vmatprep.subr.mxu0 0.0
    %96 = vmatpush1.msra.mxu0 %v57
    %97 = vmatprep.subr.mxu0 0.0
    %98 = vmatpush1.msra.mxu0 0.0
    %99 = vmatprep.subr.mxu0 0.0
    %100 = vmatpush1.msra.mxu0 0.0
    %101 = vmatprep.subr.mxu0 0.0
    %102 = vmatpush1.msra.mxu0 0.0
    %103 = vmatprep.subr.mxu0 0.0
    %104 = vmatpush1.msra.mxu0 0.0
    %105 = vmatprep.subr.mxu0 0.0
    %106 = vmatpush1.msra.mxu0 0.0
    %107 = vmatprep.subr.mxu0 0.0
    %108 = vmatpush1.msra.mxu0 0.0
    %109 = vmatprep.subr.mxu0 0.0
    %110 = vmatpush1.msra.mxu0 0.0
    %111 = vmatprep.subr.mxu0 0.0
    %112 = vmatpush1.msra.mxu0 0.0
    %113 = vmatprep.subr.mxu0 0.0
    %114 = vmatpush1.msra.mxu0 0.0
    %115 = vmatprep.subr.mxu0 0.0
    %116 = vmatpush1.msra.mxu0 0.0
    %117 = vmatprep.subr.mxu0 0.0
    %118 = vmatpush1.msra.mxu0 0.0
    %119 = vmatprep.subr.mxu0 0.0
    %120 = vmatpush1.msra.mxu0 0.0
    %121 = vmatprep.subr.mxu0 0.0
    %122 = vmatpush1.msra.mxu0 0.0
    %123 = vmatprep.subr.mxu0 0.0
    %124 = vmatpush1.msra.mxu0 0.0
    %125 = vmatprep.subr.mxu0 0.0
    %126 = vmatpush1.msra.mxu0 0.0
    %127 = vmatprep.subr.mxu0 0.0
    %128 = vmatpush1.msra.mxu0 0.0
    %129 = vmatprep.mubr.f32.mxu0 0.0
    %130 = vmatmul.mubr.f32.gmra.mrb[0].mxu0 %v41
    %v131 = vpop.f32.mrb[0].mxu0
    %v132 = vadd.f32 %v63, %v131
    %v133 = vpop.f32.mrb[0].mxu0
    %134 = vdwg.mxu0
    %v135 = vxor.u32 %v132, 2147483648
    %v136 = vmul.f32 %v135, 1.442695
    %v137 = vpow.pop %v136
    %v138 = vadd.f32 %v137, 1.0
    %v139 = vrcp.pop %v138
    %v140 = vmul.f32 1.0, %v139
    %141 = vst [vmem:[#allocation7] sm:$0xff] %v140
    // Predicated region
    $region22: #{tpu_custom_call.1} parent=1 // pred_check
      _
    $region23: #{tpu_custom_call.1} parent=1 // pred_check_branch
      %143 = sbr.rel (0) target = $region25
    $region24: #{tpu_custom_call.1} parent=1 // pred_region
      %s145 = ssub.s32 128, 128
      %146 = vsyncadd [#allocation4], %s145
      %s148 = sshll.u32 [#allocation7], 4
      %s149 = int_to_ptr.vmem [resolvable:$true] %s148
      %151 = dma.vmem_to_hbm [thread:$0]  %s149, 128, %s3, [#allocation4]
    $region25: #{tpu_custom_call.1} parent=1 // pred_fallthru
      _
    // Predicated region
    $region26: #{tpu_custom_call.1} parent=1 // pred_check
      _
    $region27: #{tpu_custom_call.1} parent=1 // pred_check_branch
      %153 = sbr.rel (0) target = $region29
    $region28: #{tpu_custom_call.1} parent=1 // pred_region
      %154 = dma.done [#allocation4], 128
    $region29: #{tpu_custom_call.1} parent=1 // pred_fallthru
      _
    %155 = vsyncpa [#allocation3], 1
    %156 = vsyncpa [#allocation6], 1
    %157 = vsyncpa [#allocation4], 1

</llo_original>
